<compile_context>
chip_gen: v7x
topology: tpu7x:2x2x1
jax: 0.10.0
libtpu: 0.0.40
codegen_flags: <defaults>
</compile_context>

<pallas_src>
import numpy as np
import jax
import jax.numpy as jnp
from jax.experimental import pallas as pl
from jax.experimental.pallas import tpu as pltpu


_LANE = 128
_TARGET_BLOCK_BYTES = 2 * 1024 * 1024     # ~2 MiB blocks -> ~85% of HBM roofline
_LANE_WIDTHS = (1024, 512, 256, 128)      # wider lane-dense slabs shave store/epilogue cost


def _scale_kernel(scale_ref, x_ref, o_ref):
    # scale_ref: (1,) f32 in SMEM;  x_ref / o_ref: (block_rows, W) tiles in VMEM.
    o_ref[...] = (x_ref[...] * scale_ref[0]).astype(o_ref.dtype)


def scale_pallas(x, scale):
    """Elementwise multiply of an arbitrary-shaped tensor by a length-1 scale."""
    orig_shape = x.shape
    dtype = x.dtype
    itemsize = jnp.dtype(dtype).itemsize
    total = int(np.prod(orig_shape)) if len(orig_shape) else 1

    if total == 0:                         # empty tensor: nothing to compute
        return x

    flat = x.reshape(-1)

    rem = total % _LANE
    if rem == 0:
        # Fast path: zero-copy lane-dense view; pick the widest lane width that divides.
        width = next(w for w in _LANE_WIDTHS if total % w == 0)
        n_padded = total
    else:
        # Uncommon ragged path: pad only up to the next multiple of 128.
        flat = jnp.pad(flat, (0, _LANE - rem))
        width = _LANE
        n_padded = total + (_LANE - rem)

    rows = n_padded // width
    # ~2 MiB per block, scaled by dtype width; always a power of two >= 512 (so it
    # satisfies sublane tiling for every dtype) or the full row extent.
    block_rows = max(1, min(_TARGET_BLOCK_BYTES // (width * itemsize), rows))
    grid = (pl.cdiv(rows, block_rows),)    # Pallas masks the ragged last row-block

    x2 = flat.reshape(rows, width)
    scale_smem = jnp.asarray(scale, jnp.float32).reshape(1)

    out2 = pl.pallas_call(
        _scale_kernel,
        out_shape=jax.ShapeDtypeStruct((rows, width), dtype),
        grid=grid,
        in_specs=[
            pl.BlockSpec(memory_space=pltpu.MemorySpace.SMEM),    # scalar param
            pl.BlockSpec((block_rows, width), lambda i: (i, 0)),  # input tile
        ],
        out_specs=pl.BlockSpec((block_rows, width), lambda i: (i, 0)),
        compiler_params=pltpu.CompilerParams(
            dimension_semantics=("parallel",)),                   # 2-TC sharding on v7x
        cost_estimate=pl.CostEstimate(
            flops=total,
            transcendentals=0,
            bytes_accessed=2 * total * itemsize),
        # TODO(synk): add input_output_aliases={1: 0} when the caller donates x
        # (unconditional aliasing would force XLA to insert a defensive copy).
    )(scale_smem, x2)

    out_flat = out2.reshape(-1)
    if rem:
        out_flat = out_flat[:total]
    return out_flat.reshape(orig_shape)


class ScalePallas:
    """JAX/Pallas equivalent of the PyTorch Scale module (forward pass)."""

    def __init__(self, init_value=1.0):
        self.scale = jnp.array([init_value], dtype=jnp.float32)
        self._fn = jax.jit(scale_pallas)

    def __call__(self, x):
        return self._fn(x, self.scale)


if __name__ == "__main__":
    key = jax.random.PRNGKey(0)
    x = jax.random.normal(key, (2, 4, 16, 16), jnp.float32)

    # Default init (scale = 1.0), as in the PyTorch module.
    mod = ScalePallas(init_value=1.0)
    y = jax.block_until_ready(mod(x))
    np.testing.assert_allclose(np.asarray(y), np.asarray(x) * 1.0,
                               rtol=1e-6, atol=1e-6)

    # Simulate a "learned" scale value and check the multiply really happens.
    mod.scale = jnp.array([1.7], dtype=jnp.float32)
    y2 = jax.block_until_ready(mod(x))
    np.testing.assert_allclose(np.asarray(y2), np.asarray(x) * 1.7,
                               rtol=1e-5, atol=1e-6)

    # Ragged shape (total not a multiple of 128) exercises the tail path.
    x3 = jax.random.normal(jax.random.PRNGKey(1), (3, 5, 37), jnp.float32)
    y3 = jax.block_until_ready(scale_pallas(x3, jnp.array([0.25], jnp.float32)))
    np.testing.assert_allclose(np.asarray(y3), np.asarray(x3) * 0.25,
                               rtol=1e-6, atol=1e-6)

    # bf16 path: kernel multiplies in f32 and rounds back to bf16.
    x4 = x.astype(jnp.bfloat16)
    y4 = jax.block_until_ready(scale_pallas(x4, jnp.array([0.5], jnp.float32)))
    ref4 = (x4.astype(jnp.float32) * 0.5).astype(jnp.bfloat16)
    np.testing.assert_allclose(np.asarray(y4.astype(jnp.float32)),
                               np.asarray(ref4.astype(jnp.float32)),
                               rtol=0, atol=0)

    # Empty tensor guard.
    x5 = jnp.zeros((0, 4), jnp.float32)
    y5 = jax.block_until_ready(scale_pallas(x5, jnp.array([2.0], jnp.float32)))
    assert y5.shape == (0, 4)

    print("KERNEL_OK")
</pallas_src>

<mosaic_0001>
module attributes {stable_mosaic.version = 11 : i64} {
  func.func @_scale_kernel(%arg0: i32, %arg1: memref<1xf32, #tpu.memory_space<smem>>, %arg2: memref<2x1024xf32, #tpu.memory_space<vmem>>, %arg3: memref<2x1024xf32, #tpu.memory_space<vmem>>) attributes {dimension_semantics = [#tpu.dimension_semantics<parallel>], iteration_bounds = array<i64: 1>, scalar_prefetch = 0 : i64, scratch_operands = 0 : i64, tpu.core_type = #tpu.core_type<tc>, window_params = [{transform_indices = @transform_0, window_bounds = array<i64: 1>}, {transform_indices = @transform_1, window_bounds = array<i64: 2, 1024>}, {transform_indices = @transform_2, window_bounds = array<i64: 2, 1024>}]} {
    %c0 = arith.constant 0 : index
    %c0_0 = arith.constant 0 : index
    %0 = vector.load %arg2[%c0, %c0_0] : memref<2x1024xf32, #tpu.memory_space<vmem>>, vector<2x1024xf32>
    %c0_1 = arith.constant 0 : index
    %1 = memref.load %arg1[%c0_1] : memref<1xf32, #tpu.memory_space<smem>>
    %2 = vector.broadcast %1 : f32 to vector<2x1024xf32>
    %3 = arith.mulf %0, %2 : vector<2x1024xf32>
    %c0_2 = arith.constant 0 : index
    %c0_3 = arith.constant 0 : index
    %4 = vector.load %arg3[%c0_2, %c0_3] : memref<2x1024xf32, #tpu.memory_space<vmem>>, vector<2x1024xf32>
    tpu.vector_store %arg3[%c0_2, %c0_3], %3 {strides = array<i32>} : memref<2x1024xf32, #tpu.memory_space<vmem>>, vector<2x1024xf32>,
    return
  }
  func.func @transform_0(%arg0: i32) -> i32 {
    %c0_i32 = arith.constant 0 : i32
    %c0_i32_0 = arith.constant 0 : i32
    return %c0_i32 : i32
  }
  func.func @transform_1(%arg0: i32) -> (i32, i32) {
    %c0_i32 = arith.constant 0 : i32
    %c0_i32_0 = arith.constant 0 : i32
    return %arg0, %c0_i32 : i32, i32
  }
  func.func @transform_2(%arg0: i32) -> (i32, i32) {
    %c0_i32 = arith.constant 0 : i32
    %c0_i32_0 = arith.constant 0 : i32
    return %arg0, %c0_i32 : i32, i32
  }
}

</mosaic_0001>

<llo_original>
// kernel: scale_pallas.1
$region0: #{scale_pallas.1}
  #allocation0 [shape = 'u32[]', space=smem, size = 0x4, offset = 0x4, fixed_abs, tag = 'smem constant byte address 0x4 - core index']
  #allocation1 [shape = 'u32[144,128]{1,0:T(1,128)}', space=vmem, size = 0x12000, scoped, tag = 'internal scratch']
  #allocation2 [shape = 'f32[1]{0:T(128)S(6)}', space=smem, size = 0x200, scoped, tag = 'scoped memory for scale_pallas.1']
  %s0 = inlined_call_operand.<no memory space> [shape: f32[1], index: 0, kind: input, shape index: {}]
  %s1 = inlined_call_operand.vmem [shape: f32[2,1024], index: 1, kind: input, shape index: {}]
  %s2 = inlined_call_operand.vmem [shape: f32[2,1024], index: 2, kind: output, shape index: {}]
  %s3 = sld [smem:[#allocation0]]
  $region18: #{scale_pallas.1} parent=0
    _
  %s5 = ssub.s32 1, %s3
  %s6 = scalar_select 0, %s5, %s3
  %7 = sst [smem:[#allocation2]] %s0
  // Predicated region
  $region2: #{scale_pallas.1} parent=0 // pred_check
    _
  $region3: #{scale_pallas.1} parent=0 // pred_check_branch
    %9 = sbr.rel (0) target = $region5
  $region4: #{scale_pallas.1} parent=0 // pred_region
    _
  $region5: #{scale_pallas.1} parent=0 // pred_fallthru
    _
  // Predicated region
  $region6: #{scale_pallas.1} parent=0 // pred_check
    _
  $region7: #{scale_pallas.1} parent=0 // pred_check_branch
    %11 = sbr.rel (0) target = $region9
  $region8: #{scale_pallas.1} parent=0 // pred_region
    _
  $region9: #{scale_pallas.1} parent=0 // pred_fallthru
    _
  %v12 = vld [vmem:[%s1] sm:$0xff]
  %v13 = vld [vmem:[%s1 + $0x8] sm:$0xff]
  %s14 = sld [smem:[#allocation2]]
  %v15 = vstv %s14
  %v16 = vmul.f32 %v12, %v15
  %v17 = vmul.f32 %v13, %v15
  %18 = vst [vmem:[%s2] sm:$0xff] %v16
  %19 = vst [vmem:[%s2 + $0x8] sm:$0xff] %v17
  // Predicated region
  $region10: #{scale_pallas.1} parent=0 // pred_check
    _
  $region11: #{scale_pallas.1} parent=0 // pred_check_branch
    %21 = sbr.rel (0) target = $region13
  $region12: #{scale_pallas.1} parent=0 // pred_region
    _
  $region13: #{scale_pallas.1} parent=0 // pred_fallthru
    _
  // Predicated region
  $region14: #{scale_pallas.1} parent=0 // pred_check
    _
  $region15: #{scale_pallas.1} parent=0 // pred_check_branch
    %23 = sbr.rel (0) target = $region17
  $region16: #{scale_pallas.1} parent=0 // pred_region
    _
  $region17: #{scale_pallas.1} parent=0 // pred_fallthru
    _

</llo_original>
